<compile_context>
chip_gen: v5e
topology: v5e:2x2
jax: 0.10.0
libtpu: 0.0.40
codegen_flags: <defaults>
</compile_context>

<pallas_src>
import functools

import jax
import jax.numpy as jnp
from jax import lax
from jax.experimental import pallas as pl
from jax.experimental.pallas import tpu as pltpu

_EPS = 1e-9


def _contrastive_loss_kernel(o1_ref, o2_ref, t_ref, out_ref, *,
                             margin, batch, tile_b, needs_mask):
    # o1_ref/o2_ref: (tile_b, D) in input dtype; t_ref: (tile_b, 1) f32
    # out_ref: (1, 8, 128) f32 -- full-tile (unmasked, lane-dense) store of the
    # broadcast partial sum.
    o1 = o1_ref[...].astype(jnp.float32)
    o2 = o2_ref[...].astype(jnp.float32)
    diff = o2 - o1                                              # VPU elementwise
    distances = jnp.sum(diff * diff, axis=1, keepdims=True)     # (tile_b, 1) XLU reduce

    t = t_ref[...]                                              # (tile_b, 1) f32
    hinge = jnp.maximum(margin - jnp.sqrt(distances + _EPS), 0.0)
    losses = 0.5 * (t * distances + (1.0 - t) * hinge * hinge)  # (tile_b, 1)

    if needs_mask:
        # Mask rows of the (possibly partial) last tile.  Keep the select --
        # OOB garbage rows may square to Inf and a 0/1 multiply would give NaN.
        i = pl.program_id(0)
        row = i * tile_b + lax.broadcasted_iota(jnp.int32, (tile_b, 1), 0)
        losses = jnp.where(row < batch, losses, 0.0)

    partial = jnp.sum(losses)                                   # per-tile partial sum
    out_ref[...] = jnp.full(out_ref.shape, partial, dtype=out_ref.dtype)


def _vmem_budget():
    """(per-input-block byte target, vmem_limit_bytes) tuned per chip family."""
    try:
        vmem_cap = pltpu.get_tpu_info().vmem_capacity_bytes
    except Exception:
        vmem_cap = 64 * 1024 * 1024  # be conservative: assume v7x (64 MiB / TC)
    if vmem_cap >= 96 * 1024 * 1024:
        # v5e / v6e: 128 MiB VMEM -> big blocks, generous scoped limit.
        return 8 * 1024 * 1024, 64 * 1024 * 1024
    # v7x: 64 MiB VMEM per TC -> 2 inputs x 2 buffers x 4 MiB = 16 MiB + slack.
    return 4 * 1024 * 1024, 48 * 1024 * 1024


def _choose_tile_b(batch, d, itemsize, block_target_bytes):
    # Sublane packing: 8 rows/vreg for 32-bit, 16 for bf16, 32 for int8/fp8.
    packing = 8 * max(1, 4 // max(1, itemsize))
    tb = block_target_bytes // max(1, d * itemsize)
    tb = max(packing, (tb // packing) * packing)
    if tb >= batch:
        # Prefer >=2 parallel tiles (v7x dual-TC sharding of the "parallel"
        # axis) whenever the batch allows packing-aligned sub-blocks.
        half = -(-batch // 2)
        half = -(-half // packing) * packing
        if half < batch:
            return half
        return batch  # single tile; block == full array dims (always legal)
    return tb
    # TODO(synk): for very large D (8*D*itemsize >> a few MiB) add a second
    # "arbitrary" grid axis over D with a VMEM accumulator to bound VMEM on v7x.


def contrastive_loss(output1, output2, target, *, margin, size_average=True, tile_b=None):
    """Pallas equivalent of ContrastiveLoss(margin)(output1, output2, target)."""
    assert output1.shape == output2.shape and output1.ndim == 2
    B, D = output1.shape

    # Target is tiny: cast/reshape in the wrapper.  Embeddings stay in their
    # original dtype (bf16 stays bf16 in HBM) and are cast in-kernel.
    t = target.astype(jnp.float32).reshape(B, 1)

    block_target_bytes, vmem_limit_bytes = _vmem_budget()
    if tile_b is None:
        tile_b = _choose_tile_b(B, D, jnp.dtype(output1.dtype).itemsize, block_target_bytes)
    tile_b = int(tile_b)
    num_tiles = -(-B // tile_b)
    needs_mask = (B % tile_b) != 0

    kernel = functools.partial(
        _contrastive_loss_kernel,
        margin=float(margin), batch=B, tile_b=tile_b, needs_mask=needs_mask,
    )

    partials = pl.pallas_call(
        kernel,
        out_shape=jax.ShapeDtypeStruct((num_tiles, 8, 128), jnp.float32),
        grid=(num_tiles,),
        in_specs=[
            pl.BlockSpec((tile_b, D), lambda i: (i, 0)),
            pl.BlockSpec((tile_b, D), lambda i: (i, 0)),
            pl.BlockSpec((tile_b, 1), lambda i: (i, 0)),
        ],
        out_specs=pl.BlockSpec((1, 8, 128), lambda i: (i, 0, 0)),
        compiler_params=pltpu.CompilerParams(
            dimension_semantics=("parallel",),
            vmem_limit_bytes=vmem_limit_bytes,
        ),
    )(output1, output2, t)

    total = jnp.sum(partials[:, 0, 0])
    if size_average:
        return total / B
    return total


def _reference(output1, output2, target, margin, size_average=True):
    distances = jnp.sum((output2.astype(jnp.float32) - output1.astype(jnp.float32)) ** 2, axis=1)
    hinge = jnp.maximum(margin - jnp.sqrt(distances + _EPS), 0.0)
    t = target.astype(jnp.float32)
    losses = 0.5 * (t * distances + (1.0 - t) * hinge**2)
    return jnp.mean(losses) if size_average else jnp.sum(losses)


if __name__ == "__main__":
    key = jax.random.PRNGKey(0)
    k1, k2, k3 = jax.random.split(key, 3)

    # Small shapes consistent with the module: a batch of embedding pairs.
    B, D = 8, 32
    margin = 1.0

    output1 = jax.random.normal(k1, (B, D), dtype=jnp.float32)
    output2 = jax.random.normal(k2, (B, D), dtype=jnp.float32)
    target = jax.random.bernoulli(k3, 0.5, (B,)).astype(jnp.int32)

    loss = contrastive_loss(output1, output2, target, margin=margin, size_average=True)
    loss = jax.block_until_ready(loss)
    ref = _reference(output1, output2, target, margin, size_average=True)
    assert jnp.allclose(loss, ref, rtol=1e-5, atol=1e-6), (loss, ref)

    # Exercise the multi-tile path (partial last tile + masking) and sum reduction.
    k4, k5, k6 = jax.random.split(jax.random.PRNGKey(1), 3)
    B2, D2 = 200, 32
    o1b = jax.random.normal(k4, (B2, D2), dtype=jnp.float32)
    o2b = jax.random.normal(k5, (B2, D2), dtype=jnp.float32)
    tgtb = jax.random.bernoulli(k6, 0.5, (B2,)).astype(jnp.int32)

    loss2 = contrastive_loss(o1b, o2b, tgtb, margin=margin, size_average=False, tile_b=64)
    loss2 = jax.block_until_ready(loss2)
    ref2 = _reference(o1b, o2b, tgtb, margin, size_average=False)
    assert jnp.allclose(loss2, ref2, rtol=1e-5, atol=1e-4), (loss2, ref2)

    # Exercise the auto-chosen tile path (>=2 parallel tiles, even split).
    loss3 = contrastive_loss(o1b, o2b, tgtb, margin=margin, size_average=True)
    loss3 = jax.block_until_ready(loss3)
    ref3 = _reference(o1b, o2b, tgtb, margin, size_average=True)
    assert jnp.allclose(loss3, ref3, rtol=1e-5, atol=1e-5), (loss3, ref3)

    print("KERNEL_OK")
</pallas_src>

<mosaic_0001>
module attributes {stable_mosaic.version = 11 : i64} {
  func.func @_contrastive_loss_kernel(%arg0: i32, %arg1: memref<8x32xf32, #tpu.memory_space<vmem>>, %arg2: memref<8x32xf32, #tpu.memory_space<vmem>>, %arg3: memref<8x1xf32, #tpu.memory_space<vmem>>, %arg4: memref<1x8x128xf32, #tpu.memory_space<vmem>>) attributes {dimension_semantics = [#tpu.dimension_semantics<parallel>], iteration_bounds = array<i64: 1>, scalar_prefetch = 0 : i64, scratch_operands = 0 : i64, tpu.core_type = #tpu.core_type<tc>, window_params = [{transform_indices = @transform_0, window_bounds = array<i64: 8, 32>}, {transform_indices = @transform_1, window_bounds = array<i64: 8, 32>}, {transform_indices = @transform_2, window_bounds = array<i64: 8, 1>}, {transform_indices = @transform_3, window_bounds = array<i64: 1, 8, 128>}]} {
    %c0 = arith.constant 0 : index
    %c0_0 = arith.constant 0 : index
    %0 = vector.load %arg1[%c0, %c0_0] : memref<8x32xf32, #tpu.memory_space<vmem>>, vector<8x32xf32>
    %c0_1 = arith.constant 0 : index
    %c0_2 = arith.constant 0 : index
    %1 = vector.load %arg2[%c0_1, %c0_2] : memref<8x32xf32, #tpu.memory_space<vmem>>, vector<8x32xf32>
    %2 = arith.subf %1, %0 : vector<8x32xf32>
    %3 = arith.mulf %2, %2 : vector<8x32xf32>
    %cst = arith.constant dense<0.000000e+00> : vector<8xf32>
    %4 = vector.multi_reduction <add>, %3, %cst [1] : vector<8x32xf32> to vector<8xf32>
    %5 = vector.shape_cast %4 : vector<8xf32> to vector<8x1xf32>
    %c0_3 = arith.constant 0 : index
    %c0_4 = arith.constant 0 : index
    %6 = vector.load %arg3[%c0_3, %c0_4] : memref<8x1xf32, #tpu.memory_space<vmem>>, vector<8x1xf32>
    %cst_5 = arith.constant 9.99999971E-10 : f32
    %7 = vector.broadcast %cst_5 : f32 to vector<8x1xf32>
    %8 = arith.addf %5, %7 : vector<8x1xf32>
    %9 = math.sqrt %8 : vector<8x1xf32>
    %cst_6 = arith.constant 1.000000e+00 : f32
    %10 = vector.broadcast %cst_6 : f32 to vector<8x1xf32>
    %11 = arith.subf %10, %9 : vector<8x1xf32>
    %cst_7 = arith.constant 0.000000e+00 : f32
    %12 = vector.broadcast %cst_7 : f32 to vector<8x1xf32>
    %13 = arith.maximumf %11, %12 : vector<8x1xf32>
    %14 = arith.mulf %6, %5 : vector<8x1xf32>
    %cst_8 = arith.constant 1.000000e+00 : f32
    %15 = vector.broadcast %cst_8 : f32 to vector<8x1xf32>
    %16 = arith.subf %15, %6 : vector<8x1xf32>
    %17 = arith.mulf %16, %13 : vector<8x1xf32>
    %18 = arith.mulf %17, %13 : vector<8x1xf32>
    %19 = arith.addf %14, %18 : vector<8x1xf32>
    %cst_9 = arith.constant 5.000000e-01 : f32
    %20 = vector.broadcast %cst_9 : f32 to vector<8x1xf32>
    %21 = arith.mulf %20, %19 : vector<8x1xf32>
    %22 = vector.shape_cast %21 : vector<8x1xf32> to vector<1x8x1xf32>
    %cst_10 = arith.constant dense<0.000000e+00> : vector<1xf32>
    %23 = vector.multi_reduction <add>, %22, %cst_10 [1, 2] : vector<1x8x1xf32> to vector<1xf32>
    %24 = vector.shape_cast %23 : vector<1xf32> to vector<1x1x1xf32>
    %25 = vector.extract %24[0, 0, 0] : f32 from vector<1x1x1xf32>
    %26 = vector.broadcast %25 : f32 to vector<1x8x128xf32>
    %c0_11 = arith.constant 0 : index
    %c0_12 = arith.constant 0 : index
    %c0_13 = arith.constant 0 : index
    %27 = vector.load %arg4[%c0_11, %c0_12, %c0_13] : memref<1x8x128xf32, #tpu.memory_space<vmem>>, vector<1x8x128xf32>
    tpu.vector_store %arg4[%c0_11, %c0_12, %c0_13], %26 {strides = array<i32>} : memref<1x8x128xf32, #tpu.memory_space<vmem>>, vector<1x8x128xf32>,
    return
  }
  func.func @transform_0(%arg0: i32) -> (i32, i32) {
    %c0_i32 = arith.constant 0 : i32
    %c0_i32_0 = arith.constant 0 : i32
    return %arg0, %c0_i32 : i32, i32
  }
  func.func @transform_1(%arg0: i32) -> (i32, i32) {
    %c0_i32 = arith.constant 0 : i32
    %c0_i32_0 = arith.constant 0 : i32
    return %arg0, %c0_i32 : i32, i32
  }
  func.func @transform_2(%arg0: i32) -> (i32, i32) {
    %c0_i32 = arith.constant 0 : i32
    %c0_i32_0 = arith.constant 0 : i32
    return %arg0, %c0_i32 : i32, i32
  }
  func.func @transform_3(%arg0: i32) -> (i32, i32, i32) {
    %c0_i32 = arith.constant 0 : i32
    %c0_i32_0 = arith.constant 0 : i32
    %c0_i32_1 = arith.constant 0 : i32
    return %arg0, %c0_i32, %c0_i32_0 : i32, i32, i32
  }
}

</mosaic_0001>

<llo_original>
// kernel: tpu_custom_call.1
$region0: #{tpu_custom_call.1}
  #allocation0 [shape = 'u32[]', space=smem, size = 0x4, offset = 0x4, fixed_abs, tag = 'smem constant byte address 0x4 - core index']
  #allocation1 [shape = 'u32[72,128]{1,0:T(1,128)}', space=vmem, size = 0x9000, scoped, tag = 'internal scratch']
  %s0 = inlined_call_operand.vmem [shape: f32[8,32], index: 0, kind: input, shape index: {}]
  %s1 = inlined_call_operand.hbm [shape: f32[8,32], index: 1, kind: input, shape index: {}]
  %s2 = inlined_call_operand.vmem [shape: f32[8,1], index: 2, kind: input, shape index: {}]
  %s3 = inlined_call_operand.hbm [shape: f32[1,8,128], index: 3, kind: output, shape index: {}]
  %s4 = sld [smem:[#allocation0]]
  $region26: #{tpu_custom_call.1} parent=0
    _
  %s6 = ssub.s32 1, %s4
  %s7 = scalar_select 0, %s6, %s4
  $region1: #{tpu_custom_call.1} parent=0
    #allocation2 [shape = 'u8[4096]{0}', space=vmem, size = 0x1000, scoped, tag = 'input window, operand 1, single buffered']
    #allocation3 [shape = 's32[1]{0}', space=sflag, size = 0x4, scoped, tag = 'scoped memory for tpu_custom_call.1']
    #allocation4 [shape = 's32[1]{0}', space=sflag, size = 0x4, scoped, tag = 'scoped memory for tpu_custom_call.1']
    #allocation5 [shape = 'u8[4096]{0}', space=vmem, size = 0x1000, scoped, tag = 'output window, operand 0, single buffered']
    %8 = vsyncpa [#allocation3], 0
    %9 = vsyncpa [#allocation4], 0
    // Predicated region
    $region2: #{tpu_custom_call.1} parent=1 // pred_check
      _
    $region3: #{tpu_custom_call.1} parent=1 // pred_check_branch
      %11 = sbr.rel (0) target = $region5
    $region4: #{tpu_custom_call.1} parent=1 // pred_region
      _
    $region5: #{tpu_custom_call.1} parent=1 // pred_fallthru
      _
    // Predicated region
    $region6: #{tpu_custom_call.1} parent=1 // pred_check
      _
    $region7: #{tpu_custom_call.1} parent=1 // pred_check_branch
      %13 = sbr.rel (0) target = $region9
    $region8: #{tpu_custom_call.1} parent=1 // pred_region
      %15 = vsyncadd [#allocation3], 0
      %s17 = sshll.u32 %s1, 4
      %s18 = int_to_ptr.hbm [resolvable:$true] %s17
      %s19 = sshll.u32 [#allocation2], 4
      %s20 = int_to_ptr.vmem [resolvable:$true] %s19
      %22 = dma.hbm_to_vmem [thread:$0]  %s18, 128, %s20, [#allocation3]
    $region9: #{tpu_custom_call.1} parent=1 // pred_fallthru
      _
    // Predicated region
    $region10: #{tpu_custom_call.1} parent=1 // pred_check
      _
    $region11: #{tpu_custom_call.1} parent=1 // pred_check_branch
      %24 = sbr.rel (0) target = $region13
    $region12: #{tpu_custom_call.1} parent=1 // pred_region
      _
    $region13: #{tpu_custom_call.1} parent=1 // pred_fallthru
      _
    // Predicated region
    $region14: #{tpu_custom_call.1} parent=1 // pred_check
      _
    $region15: #{tpu_custom_call.1} parent=1 // pred_check_branch
      %26 = sbr.rel (0) target = $region17
    $region16: #{tpu_custom_call.1} parent=1 // pred_region
      %28 = dma.done [#allocation3], 128
    $region17: #{tpu_custom_call.1} parent=1 // pred_fallthru
      _
    %v29 = vld [vmem:[%s0] sm:$0xff]
    %v30 = vld [vmem:[#allocation2] sm:$0xff]
    %v31 = vsub.f32 %v30, %v29
    %v32 = vmul.f32 %v31, %v31
    %vm33 = vcmask 261120
    %v34 = vsel %vm33, %v32, 0.0
    %35 = vadd.xlane.f32.xlu0 %v34
    %v36 = vpop.xlane.xlu0 %35
    %v37 = vld [vmem:[%s2] sm:$0xff]
    %v38 = vadd.f32 %v36, 1e-09
    %v39 = vrsqrt.pop %v38
    %v40 = vmul.f32 %v39, %v38
    %v41 = vmul.f32 %v40, %v39
    %v42 = vmul.f32 0.5, %v41
    %v43 = vsub.f32 1.5, %v42
    %v44 = vmul.f32 %v39, %v43
    %v45 = vmul.f32 %v38, %v44
    %vm46 = vcmp.eq.f32.partialorder %v38, inf
    %v47 = vsel %vm46, %v38, %v45
    %vm48 = vcmp.eq.f32.partialorder %v38, 0.0
    %v49 = vand.u32 %v38, 2147483648
    %v50 = vsel %vm48, %v49, %v47
    %v51 = vsub.f32 1.0, %v50
    %v52 = vmax.f32 %v51, 0.0
    %v53 = vmul.f32 %v37, %v36
    %v54 = vsub.f32 1.0, %v37
    %v55 = vmul.f32 %v54, %v52
    %v56 = vmul.f32 %v55, %v52
    %v57 = vadd.f32 %v53, %v56
    %v58 = vmul.f32 %v57, 0.5
    %vm59 = vcmask 7168
    %v60 = vsel %vm59, %v58, 0.0
    %61 = vadd.xlane.f32.xlu0 %v60
    %v62 = vpop.xlane.xlu0 %61
    %v63 = vrot.slane %v62, 4
    %v64 = vadd.f32 %v62, %v63
    %v65 = vrot.slane %v64, 2
    %v66 = vadd.f32 %v64, %v65
    %v67 = vrot.slane %v66, 1
    %v68 = vadd.f32 %v66, %v67
    %s69 = vtos %v68
    %v70 = vstv %s69
    %71 = vst [vmem:[#allocation5] sm:$0xff] %v70
    // Predicated region
    $region18: #{tpu_custom_call.1} parent=1 // pred_check
      _
    $region19: #{tpu_custom_call.1} parent=1 // pred_check_branch
      %73 = sbr.rel (0) target = $region21
    $region20: #{tpu_custom_call.1} parent=1 // pred_region
      %75 = vsyncadd [#allocation4], 0
      %s77 = sshll.u32 [#allocation5], 4
      %s78 = int_to_ptr.vmem [resolvable:$true] %s77
      %s79 = sshll.u32 %s3, 4
      %s80 = int_to_ptr.hbm [resolvable:$true] %s79
      %82 = dma.vmem_to_hbm [thread:$0]  %s78, 128, %s80, [#allocation4]
    $region21: #{tpu_custom_call.1} parent=1 // pred_fallthru
      _
    // Predicated region
    $region22: #{tpu_custom_call.1} parent=1 // pred_check
      _
    $region23: #{tpu_custom_call.1} parent=1 // pred_check_branch
      %84 = sbr.rel (0) target = $region25
    $region24: #{tpu_custom_call.1} parent=1 // pred_region
      %86 = dma.done [#allocation4], 128
    $region25: #{tpu_custom_call.1} parent=1 // pred_fallthru
      _
    %87 = vsyncpa [#allocation3], 1
    %88 = vsyncpa [#allocation4], 1

</llo_original>
